<compile_context>
chip_gen: v5e
topology: v5e:2x2
jax: 0.10.0
libtpu: 0.0.40
codegen_flags: <defaults>
</compile_context>

<pallas_src>
import jax
import jax.numpy as jnp
from jax.experimental import pallas as pl
from jax.experimental.pallas import tpu as pltpu

BN_EPS = 1e-5
PAD = 128          # lane-dense padded width for both hidden layers
H1, H2 = 100, 10   # true hidden widths (fc1 out, fc2 out)


def predictor_kernel(x_ref, w1t_ref, bn_ref, w2t_ref, w3t_ref, aux_ref, waux_ref,
                     probs_ref, logits_ref):
    bnp = bn_ref[...]                      # (4, PAD): rows = [g1, be1, g2, be2]

    # ---- fc1 (in-kernel bf16 cast of x, bf16 W1^T, f32 MXU accumulation)
    #      + BatchNorm1d (batch stats, biased var) + relu.
    # fc1 bias omitted: exactly cancelled by the BN mean subtraction.
    h1 = jnp.dot(x_ref[...].astype(jnp.bfloat16), w1t_ref[...],
                 preferred_element_type=jnp.float32)
    mu1 = jnp.mean(h1, axis=0, keepdims=True)
    var1 = jnp.mean((h1 - mu1) * (h1 - mu1), axis=0, keepdims=True)
    h1 = (h1 - mu1) * jax.lax.rsqrt(var1 + BN_EPS) * bnp[0:1, :] + bnp[1:2, :]
    h1 = jnp.maximum(h1, 0.0)

    # ---- fc2 (bf16 operands, f32 acc) + BatchNorm1d + relu (128-padded).
    # Padded columns stay exactly 0 (zero weights, gamma=beta=0).
    h2 = jnp.dot(h1.astype(jnp.bfloat16), w2t_ref[...],
                 preferred_element_type=jnp.float32)
    mu2 = jnp.mean(h2, axis=0, keepdims=True)
    var2 = jnp.mean((h2 - mu2) * (h2 - mu2), axis=0, keepdims=True)
    h2 = (h2 - mu2) * jax.lax.rsqrt(var2 + BN_EPS) * bnp[2:3, :] + bnp[3:4, :]
    h2 = jnp.maximum(h2, 0.0)

    # ---- fc3 on cat([h2, RR, prevRR, prev_eightRR]) decomposed as
    #   h2_pad @ W3[:, :10]^T_pad        (bf16 MXU dot, f32 acc)
    # + sum_k aux[:, k] * W3[:, 10+k]^T  (3 VPU broadcast-FMAs, f32)
    # + b3                               (broadcast add)
    waux = waux_ref[...]                   # (4, C) f32: [w_RR; w_prevRR; w_p8RR; b3]
    aux = aux_ref[...]                     # (B, 3) f32: [RR, prevRR, prev_eightRR]
    logits = jnp.dot(h2.astype(jnp.bfloat16), w3t_ref[...],
                     preferred_element_type=jnp.float32)
    logits = logits + waux[3:4, :]
    logits = logits + aux[:, 0:1] * waux[0:1, :]
    logits = logits + aux[:, 1:2] * waux[1:2, :]
    logits = logits + aux[:, 2:3] * waux[2:3, :]
    logits_ref[...] = logits

    # ---- softmax(dim=1) (f32; exact reciprocal on the EUP) ----
    m = jnp.max(logits, axis=1, keepdims=True)
    e = jnp.exp(logits - m)
    probs_ref[...] = e * pl.reciprocal(jnp.sum(e, axis=1, keepdims=True), approx=False)


def pack_params(params):
    """Pack / pad PyTorch-layout params into the 5 weight operands the kernel
    consumes.  Done ONCE, outside the hot path."""
    C = params["w3"].shape[0]
    in_feats = params["w1"].shape[1]

    w1t = jnp.zeros((in_feats, PAD), jnp.float32).at[:, :H1].set(params["w1"].T)
    w1t = w1t.astype(jnp.bfloat16)                      # bf16 MXU operand

    bn = jnp.zeros((4, PAD), jnp.float32)
    bn = bn.at[0, :H1].set(params["bn1_g"])
    bn = bn.at[1, :H1].set(params["bn1_b"])
    bn = bn.at[2, :H2].set(params["bn2_g"])
    bn = bn.at[3, :H2].set(params["bn2_b"])

    w2t = jnp.zeros((PAD, PAD), jnp.float32).at[:H1, :H2].set(params["w2"].T)
    w2t = w2t.astype(jnp.bfloat16)                      # bf16 MXU operand

    w3t = jnp.zeros((PAD, C), jnp.float32).at[:H2, :].set(params["w3"][:, :H2].T)
    w3t = w3t.astype(jnp.bfloat16)                      # bf16 MXU operand

    waux = jnp.concatenate([params["w3"][:, H2:].T,             # (3, C): RR cols
                            params["b3"].reshape(1, -1)], 0)    # + bias -> (4, C), f32
    return w1t, bn, w2t, w3t, waux


@jax.jit
def predictor_forward(x, rr, prr, p8, packed):
    """Hot path: one tiny fused concat + one pallas_call (x stays f32, cast in-kernel)."""
    w1t, bn, w2t, w3t, waux = packed
    B = x.shape[0]
    C = waux.shape[1]
    aux = jnp.concatenate([rr, prr, p8], axis=1)        # (B, 3) f32

    vmem = pl.BlockSpec(memory_space=pltpu.MemorySpace.VMEM)
    probs, logits = pl.pallas_call(
        predictor_kernel,
        out_shape=(jax.ShapeDtypeStruct((B, C), jnp.float32),   # softmax(x_prev)
                   jax.ShapeDtypeStruct((B, C), jnp.float32)),  # x_prev
        in_specs=[vmem] * 7,
        out_specs=(vmem, vmem),
    )(x, w1t, bn, w2t, w3t, aux, waux)
    return probs, logits


def init_params(key, num_classes):
    """Deterministic init mimicking PyTorch defaults (U(-1/sqrt(fan_in), ...))."""
    ks = jax.random.split(key, 6)

    def lin(kw, kb, fan_in, fan_out):
        bound = 1.0 / jnp.sqrt(jnp.float32(fan_in))
        w = jax.random.uniform(kw, (fan_out, fan_in), jnp.float32, -bound, bound)
        b = jax.random.uniform(kb, (fan_out,), jnp.float32, -bound, bound)
        return w, b

    w1, b1 = lin(ks[0], ks[1], 48 * 18, 100)
    w2, b2 = lin(ks[2], ks[3], 100, 10)
    w3, b3 = lin(ks[4], ks[5], 13, num_classes)
    return dict(
        w1=w1, b1=b1, bn1_g=jnp.ones((100,), jnp.float32), bn1_b=jnp.zeros((100,), jnp.float32),
        w2=w2, b2=b2, bn2_g=jnp.ones((10,), jnp.float32), bn2_b=jnp.zeros((10,), jnp.float32),
        w3=w3, b3=b3,
    )


def reference_forward(x, rr, prr, p8, params, *, match_kernel_bf16=False):
    """Pure-JAX reference (exact PyTorch training-mode math).  With
    match_kernel_bf16=True, MXU operands are cast to bf16 (f32 accumulation)
    at the same points the kernel does, to validate kernel structure (bias
    drop, lane padding, aux decomposition) at matched precision."""
    cast = (lambda a: a.astype(jnp.bfloat16)) if match_kernel_bf16 else (lambda a: a)

    def bn(h, g, b):
        mu = jnp.mean(h, axis=0, keepdims=True)
        var = jnp.mean((h - mu) ** 2, axis=0, keepdims=True)
        return (h - mu) * jax.lax.rsqrt(var + BN_EPS) * g + b

    h1 = jnp.dot(cast(x), cast(params["w1"].T),
                 preferred_element_type=jnp.float32) + params["b1"]
    h1 = jax.nn.relu(bn(h1, params["bn1_g"], params["bn1_b"]))
    h2 = jnp.dot(cast(h1), cast(params["w2"].T),
                 preferred_element_type=jnp.float32) + params["b2"]
    h2 = jax.nn.relu(bn(h2, params["bn2_g"], params["bn2_b"]))
    if match_kernel_bf16:
        head = jnp.dot(cast(h2), cast(params["w3"][:, :H2].T),
                       preferred_element_type=jnp.float32)
        tail = jnp.concatenate([rr, prr, p8], axis=1) @ params["w3"][:, H2:].T
        logits = head + tail + params["b3"]
    else:
        cat = jnp.concatenate([h2, rr, prr, p8], axis=1)
        logits = cat @ params["w3"].T + params["b3"]
    return jax.nn.softmax(logits, axis=1), logits


if __name__ == "__main__":
    B = 8
    NUM_CLASSES = 5

    key = jax.random.PRNGKey(0)
    k_param, k_x, k_rr, k_prr, k_p8 = jax.random.split(key, 5)

    params = init_params(k_param, NUM_CLASSES)
    x = jax.random.normal(k_x, (B, 48 * 18), jnp.float32)
    rr = jax.random.normal(k_rr, (B, 1), jnp.float32)
    prr = jax.random.normal(k_prr, (B, 1), jnp.float32)
    p8 = jax.random.normal(k_p8, (B, 1), jnp.float32)

    packed = pack_params(params)                 # one-time, outside the hot path
    jax.block_until_ready(packed)

    probs, logits = predictor_forward(x, rr, prr, p8, packed)
    jax.block_until_ready((probs, logits))
    assert probs.shape == (B, NUM_CLASSES) and logits.shape == (B, NUM_CLASSES)

    # Tight check vs. a bf16-matched reference: validates kernel structure
    # (bias drop, lane padding, aux FMA decomposition) at matched precision.
    rp_b, rl_b = reference_forward(x, rr, prr, p8, params, match_kernel_bf16=True)
    assert jnp.allclose(logits, rl_b, atol=5e-3, rtol=5e-3), "logits vs bf16-matched ref"
    assert jnp.allclose(probs, rp_b, atol=1e-2, rtol=1e-2), "probs vs bf16-matched ref"

    # Loose check vs. the exact-f32 PyTorch training-mode math: validates that
    # the bf16 MXU operands only introduce bf16-level deviation.
    rp_f, rl_f = reference_forward(x, rr, prr, p8, params, match_kernel_bf16=False)
    assert jnp.allclose(logits, rl_f, atol=1e-1, rtol=1e-1), "logits vs f32 ref"
    assert jnp.allclose(probs, rp_f, atol=5e-2, rtol=5e-2), "probs vs f32 ref"

    print("KERNEL_OK")
</pallas_src>

<mosaic_0001>
module attributes {stable_mosaic.version = 11 : i64} {
  func.func @predictor_kernel(%arg0: memref<8x864xf32, #tpu.memory_space<vmem>>, %arg1: memref<864x128xbf16, #tpu.memory_space<vmem>>, %arg2: memref<4x128xf32, #tpu.memory_space<vmem>>, %arg3: memref<128x128xbf16, #tpu.memory_space<vmem>>, %arg4: memref<128x5xbf16, #tpu.memory_space<vmem>>, %arg5: memref<8x3xf32, #tpu.memory_space<vmem>>, %arg6: memref<4x5xf32, #tpu.memory_space<vmem>>, %arg7: memref<8x5xf32, #tpu.memory_space<vmem>>, %arg8: memref<8x5xf32, #tpu.memory_space<vmem>>) attributes {dimension_semantics = [], scalar_prefetch = 0 : i64, scratch_operands = 0 : i64, tpu.core_type = #tpu.core_type<tc>} {
    %c0 = arith.constant 0 : index
    %c0_0 = arith.constant 0 : index
    %0 = vector.load %arg2[%c0, %c0_0] : memref<4x128xf32, #tpu.memory_space<vmem>>, vector<4x128xf32>
    %c0_1 = arith.constant 0 : index
    %c0_2 = arith.constant 0 : index
    %1 = vector.load %arg0[%c0_1, %c0_2] : memref<8x864xf32, #tpu.memory_space<vmem>>, vector<8x864xf32>
    %2 = arith.truncf %1 : vector<8x864xf32> to vector<8x864xbf16>
    %c0_3 = arith.constant 0 : index
    %c0_4 = arith.constant 0 : index
    %3 = vector.load %arg1[%c0_3, %c0_4] : memref<864x128xbf16, #tpu.memory_space<vmem>>, vector<864x128xbf16>
    %cst = arith.constant dense<0.000000e+00> : vector<8x128xf32>
    %4 = tpu.matmul %2, %3, %cst {dimension_numbers = #tpu.dot_dimension_numbers<[1], [0], [0], [1], [0, 0, 1, 1], [], []>} : vector<8x864xbf16>, vector<864x128xbf16>, vector<8x128xf32> -> vector<8x128xf32>
    %cst_5 = arith.constant dense<0.000000e+00> : vector<128xf32>
    %5 = vector.multi_reduction <add>, %4, %cst_5 [0] : vector<8x128xf32> to vector<128xf32>
    %6 = vector.shape_cast %5 : vector<128xf32> to vector<1x128xf32>
    %cst_6 = arith.constant 8.000000e+00 : f32
    %7 = vector.broadcast %cst_6 : f32 to vector<1x128xf32>
    %8 = arith.divf %6, %7 : vector<1x128xf32>
    %9 = vector.broadcast %8 : vector<1x128xf32> to vector<8x128xf32>
    %10 = arith.subf %4, %9 : vector<8x128xf32>
    %11 = vector.broadcast %8 : vector<1x128xf32> to vector<8x128xf32>
    %12 = arith.subf %4, %11 : vector<8x128xf32>
    %13 = arith.mulf %10, %12 : vector<8x128xf32>
    %cst_7 = arith.constant dense<0.000000e+00> : vector<128xf32>
    %14 = vector.multi_reduction <add>, %13, %cst_7 [0] : vector<8x128xf32> to vector<128xf32>
    %15 = vector.shape_cast %14 : vector<128xf32> to vector<1x128xf32>
    %cst_8 = arith.constant 8.000000e+00 : f32
    %16 = vector.broadcast %cst_8 : f32 to vector<1x128xf32>
    %17 = arith.divf %15, %16 : vector<1x128xf32>
    %18 = vector.broadcast %8 : vector<1x128xf32> to vector<8x128xf32>
    %19 = arith.subf %4, %18 : vector<8x128xf32>
    %cst_9 = arith.constant 9.99999974E-6 : f32
    %20 = vector.broadcast %cst_9 : f32 to vector<1x128xf32>
    %21 = arith.addf %17, %20 : vector<1x128xf32>
    %22 = math.rsqrt %21 : vector<1x128xf32>
    %23 = vector.broadcast %22 : vector<1x128xf32> to vector<8x128xf32>
    %24 = arith.mulf %19, %23 : vector<8x128xf32>
    %25 = vector.extract_strided_slice %0 {offsets = [0, 0], sizes = [1, 128], strides = [1, 1]} : vector<4x128xf32> to vector<1x128xf32>
    %26 = vector.broadcast %25 : vector<1x128xf32> to vector<8x128xf32>
    %27 = arith.mulf %24, %26 : vector<8x128xf32>
    %28 = vector.extract_strided_slice %0 {offsets = [1, 0], sizes = [1, 128], strides = [1, 1]} : vector<4x128xf32> to vector<1x128xf32>
    %29 = vector.broadcast %28 : vector<1x128xf32> to vector<8x128xf32>
    %30 = arith.addf %27, %29 : vector<8x128xf32>
    %cst_10 = arith.constant 0.000000e+00 : f32
    %31 = vector.broadcast %cst_10 : f32 to vector<8x128xf32>
    %32 = arith.maximumf %30, %31 : vector<8x128xf32>
    %33 = arith.truncf %32 : vector<8x128xf32> to vector<8x128xbf16>
    %c0_11 = arith.constant 0 : index
    %c0_12 = arith.constant 0 : index
    %34 = vector.load %arg3[%c0_11, %c0_12] : memref<128x128xbf16, #tpu.memory_space<vmem>>, vector<128x128xbf16>
    %cst_13 = arith.constant dense<0.000000e+00> : vector<8x128xf32>
    %35 = tpu.matmul %33, %34, %cst_13 {dimension_numbers = #tpu.dot_dimension_numbers<[1], [0], [0], [1], [0, 0, 1, 1], [], []>} : vector<8x128xbf16>, vector<128x128xbf16>, vector<8x128xf32> -> vector<8x128xf32>
    %cst_14 = arith.constant dense<0.000000e+00> : vector<128xf32>
    %36 = vector.multi_reduction <add>, %35, %cst_14 [0] : vector<8x128xf32> to vector<128xf32>
    %37 = vector.shape_cast %36 : vector<128xf32> to vector<1x128xf32>
    %cst_15 = arith.constant 8.000000e+00 : f32
    %38 = vector.broadcast %cst_15 : f32 to vector<1x128xf32>
    %39 = arith.divf %37, %38 : vector<1x128xf32>
    %40 = vector.broadcast %39 : vector<1x128xf32> to vector<8x128xf32>
    %41 = arith.subf %35, %40 : vector<8x128xf32>
    %42 = vector.broadcast %39 : vector<1x128xf32> to vector<8x128xf32>
    %43 = arith.subf %35, %42 : vector<8x128xf32>
    %44 = arith.mulf %41, %43 : vector<8x128xf32>
    %cst_16 = arith.constant dense<0.000000e+00> : vector<128xf32>
    %45 = vector.multi_reduction <add>, %44, %cst_16 [0] : vector<8x128xf32> to vector<128xf32>
    %46 = vector.shape_cast %45 : vector<128xf32> to vector<1x128xf32>
    %cst_17 = arith.constant 8.000000e+00 : f32
    %47 = vector.broadcast %cst_17 : f32 to vector<1x128xf32>
    %48 = arith.divf %46, %47 : vector<1x128xf32>
    %49 = vector.broadcast %39 : vector<1x128xf32> to vector<8x128xf32>
    %50 = arith.subf %35, %49 : vector<8x128xf32>
    %cst_18 = arith.constant 9.99999974E-6 : f32
    %51 = vector.broadcast %cst_18 : f32 to vector<1x128xf32>
    %52 = arith.addf %48, %51 : vector<1x128xf32>
    %53 = math.rsqrt %52 : vector<1x128xf32>
    %54 = vector.broadcast %53 : vector<1x128xf32> to vector<8x128xf32>
    %55 = arith.mulf %50, %54 : vector<8x128xf32>
    %56 = vector.extract_strided_slice %0 {offsets = [2, 0], sizes = [1, 128], strides = [1, 1]} : vector<4x128xf32> to vector<1x128xf32>
    %57 = vector.broadcast %56 : vector<1x128xf32> to vector<8x128xf32>
    %58 = arith.mulf %55, %57 : vector<8x128xf32>
    %59 = vector.extract_strided_slice %0 {offsets = [3, 0], sizes = [1, 128], strides = [1, 1]} : vector<4x128xf32> to vector<1x128xf32>
    %60 = vector.broadcast %59 : vector<1x128xf32> to vector<8x128xf32>
    %61 = arith.addf %58, %60 : vector<8x128xf32>
    %cst_19 = arith.constant 0.000000e+00 : f32
    %62 = vector.broadcast %cst_19 : f32 to vector<8x128xf32>
    %63 = arith.maximumf %61, %62 : vector<8x128xf32>
    %c0_20 = arith.constant 0 : index
    %c0_21 = arith.constant 0 : index
    %64 = vector.load %arg6[%c0_20, %c0_21] : memref<4x5xf32, #tpu.memory_space<vmem>>, vector<4x5xf32>
    %c0_22 = arith.constant 0 : index
    %c0_23 = arith.constant 0 : index
    %65 = vector.load %arg5[%c0_22, %c0_23] : memref<8x3xf32, #tpu.memory_space<vmem>>, vector<8x3xf32>
    %66 = arith.truncf %63 : vector<8x128xf32> to vector<8x128xbf16>
    %c0_24 = arith.constant 0 : index
    %c0_25 = arith.constant 0 : index
    %67 = vector.load %arg4[%c0_24, %c0_25] : memref<128x5xbf16, #tpu.memory_space<vmem>>, vector<128x5xbf16>
    %cst_26 = arith.constant dense<0.000000e+00> : vector<8x5xf32>
    %68 = tpu.matmul %66, %67, %cst_26 {dimension_numbers = #tpu.dot_dimension_numbers<[1], [0], [0], [1], [0, 0, 1, 1], [], []>} : vector<8x128xbf16>, vector<128x5xbf16>, vector<8x5xf32> -> vector<8x5xf32>
    %69 = vector.extract_strided_slice %64 {offsets = [3, 0], sizes = [1, 5], strides = [1, 1]} : vector<4x5xf32> to vector<1x5xf32>
    %70 = vector.broadcast %69 : vector<1x5xf32> to vector<8x5xf32>
    %71 = arith.addf %68, %70 : vector<8x5xf32>
    %72 = vector.extract_strided_slice %65 {offsets = [0, 0], sizes = [8, 1], strides = [1, 1]} : vector<8x3xf32> to vector<8x1xf32>
    %73 = vector.extract_strided_slice %64 {offsets = [0, 0], sizes = [1, 5], strides = [1, 1]} : vector<4x5xf32> to vector<1x5xf32>
    %74 = vector.broadcast %72 : vector<8x1xf32> to vector<8x5xf32>
    %75 = vector.broadcast %73 : vector<1x5xf32> to vector<8x5xf32>
    %76 = arith.mulf %74, %75 : vector<8x5xf32>
    %77 = arith.addf %71, %76 : vector<8x5xf32>
    %78 = vector.extract_strided_slice %65 {offsets = [0, 1], sizes = [8, 1], strides = [1, 1]} : vector<8x3xf32> to vector<8x1xf32>
    %79 = vector.extract_strided_slice %64 {offsets = [1, 0], sizes = [1, 5], strides = [1, 1]} : vector<4x5xf32> to vector<1x5xf32>
    %80 = vector.broadcast %78 : vector<8x1xf32> to vector<8x5xf32>
    %81 = vector.broadcast %79 : vector<1x5xf32> to vector<8x5xf32>
    %82 = arith.mulf %80, %81 : vector<8x5xf32>
    %83 = arith.addf %77, %82 : vector<8x5xf32>
    %84 = vector.extract_strided_slice %65 {offsets = [0, 2], sizes = [8, 1], strides = [1, 1]} : vector<8x3xf32> to vector<8x1xf32>
    %85 = vector.extract_strided_slice %64 {offsets = [2, 0], sizes = [1, 5], strides = [1, 1]} : vector<4x5xf32> to vector<1x5xf32>
    %86 = vector.broadcast %84 : vector<8x1xf32> to vector<8x5xf32>
    %87 = vector.broadcast %85 : vector<1x5xf32> to vector<8x5xf32>
    %88 = arith.mulf %86, %87 : vector<8x5xf32>
    %89 = arith.addf %83, %88 : vector<8x5xf32>
    %c0_27 = arith.constant 0 : index
    %c0_28 = arith.constant 0 : index
    %90 = vector.load %arg8[%c0_27, %c0_28] : memref<8x5xf32, #tpu.memory_space<vmem>>, vector<8x5xf32>
    tpu.vector_store %arg8[%c0_27, %c0_28], %89 {strides = array<i32>} : memref<8x5xf32, #tpu.memory_space<vmem>>, vector<8x5xf32>,
    %cst_29 = arith.constant dense<0xFF800000> : vector<8xf32>
    %91 = vector.multi_reduction <maximumf>, %89, %cst_29 [1] : vector<8x5xf32> to vector<8xf32>
    %92 = vector.shape_cast %91 : vector<8xf32> to vector<8x1xf32>
    %93 = vector.broadcast %92 : vector<8x1xf32> to vector<8x5xf32>
    %94 = arith.subf %89, %93 : vector<8x5xf32>
    %95 = math.exp %94 : vector<8x5xf32>
    %cst_30 = arith.constant dense<0.000000e+00> : vector<8xf32>
    %96 = vector.multi_reduction <add>, %95, %cst_30 [1] : vector<8x5xf32> to vector<8xf32>
    %97 = vector.shape_cast %96 : vector<8xf32> to vector<8x1xf32>
    %98 = tpu.reciprocal %97 : vector<8x1xf32> -> vector<8x1xf32>
    %99 = vector.broadcast %98 : vector<8x1xf32> to vector<8x5xf32>
    %100 = arith.mulf %95, %99 : vector<8x5xf32>
    %c0_31 = arith.constant 0 : index
    %c0_32 = arith.constant 0 : index
    %101 = vector.load %arg7[%c0_31, %c0_32] : memref<8x5xf32, #tpu.memory_space<vmem>>, vector<8x5xf32>
    tpu.vector_store %arg7[%c0_31, %c0_32], %100 {strides = array<i32>} : memref<8x5xf32, #tpu.memory_space<vmem>>, vector<8x5xf32>,
    return
  }
}

</mosaic_0001>

<llo_original>
// kernel: predictor_forward.1
$region0: #{predictor_forward.1}
  #allocation0 [shape = 'u32[]', space=smem, size = 0x4, offset = 0x4, fixed_abs, tag = 'smem constant byte address 0x4 - core index']
  #allocation1 [shape = 'u32[72,128]{1,0:T(1,128)}', space=vmem, size = 0x9000, scoped, tag = 'internal scratch']
  %s0 = inlined_call_operand.hbm [shape: f32[8,864], index: 0, kind: input, shape index: {}]
  %s1 = inlined_call_operand.hbm [shape: bf16[864,128], index: 1, kind: input, shape index: {}]
  %s2 = inlined_call_operand.vmem [shape: f32[4,128], index: 2, kind: input, shape index: {}]
  %s3 = inlined_call_operand.vmem [shape: bf16[128,128], index: 3, kind: input, shape index: {}]
  %s4 = inlined_call_operand.vmem [shape: bf16[128,5], index: 4, kind: input, shape index: {}]
  %s5 = inlined_call_operand.vmem [shape: f32[8,3], index: 5, kind: input, shape index: {}]
  %s6 = inlined_call_operand.vmem [shape: f32[4,5], index: 6, kind: input, shape index: {}]
  %s7 = inlined_call_operand.hbm [shape: f32[8,5], index: 7, kind: output, shape index: {0}]
  %s8 = inlined_call_operand.hbm [shape: f32[8,5], index: 8, kind: output, shape index: {1}]
  %9 = xla_tuple %s7, %s8
  %s10 = sld [smem:[#allocation0]]
  $region54: #{predictor_forward.1} parent=0
    _
  %s12 = ssub.s32 1, %s10
  %s13 = scalar_select 0, %s12, %s10
  $region1: #{predictor_forward.1} parent=0
    #allocation2 [shape = 'u8[28672]{0}', space=vmem, size = 0x7000, scoped, tag = 'input window, operand 0, single buffered']
    #allocation3 [shape = 's32[1]{0}', space=sflag, size = 0x4, scoped, tag = 'scoped memory for predictor_forward.1']
    #allocation4 [shape = 's32[1]{0}', space=sflag, size = 0x4, scoped, tag = 'scoped memory for predictor_forward.1']
    #allocation5 [shape = 'u8[221184]{0}', space=vmem, size = 0x36000, scoped, tag = 'input window, operand 1, single buffered']
    #allocation6 [shape = 's32[1]{0}', space=sflag, size = 0x4, scoped, tag = 'scoped memory for predictor_forward.1']
    #allocation7 [shape = 'u8[4096]{0}', space=vmem, size = 0x1000, scoped, tag = 'output window, operand 0, single buffered']
    #allocation8 [shape = 'u8[4096]{0}', space=vmem, size = 0x1000, scoped, tag = 'output window, operand 1, single buffered']
    #allocation9 [shape = 's32[1]{0}', space=sflag, size = 0x4, scoped, tag = 'scoped memory for predictor_forward.1']
    %14 = vsyncpa [#allocation3], 0
    %15 = vsyncpa [#allocation6], 0
    %16 = vsyncpa [#allocation4], 0
    %17 = vsyncpa [#allocation9], 0
    // Predicated region
    $region2: #{predictor_forward.1} parent=1 // pred_check
      _
    $region3: #{predictor_forward.1} parent=1 // pred_check_branch
      %19 = sbr.rel (0) target = $region5
    $region4: #{predictor_forward.1} parent=1 // pred_region
      %21 = vsyncadd [#allocation3], 0
      %s23 = sshll.u32 %s0, 4
      %s24 = int_to_ptr.hbm [resolvable:$true] %s23
      %s25 = sshll.u32 [#allocation2], 4
      %s26 = int_to_ptr.vmem [resolvable:$true] %s25
      %28 = dma.hbm_to_vmem [thread:$0]  %s24, 896, %s26, [#allocation3]
    $region5: #{predictor_forward.1} parent=1 // pred_fallthru
      _
    // Predicated region
    $region6: #{predictor_forward.1} parent=1 // pred_check
      _
    $region7: #{predictor_forward.1} parent=1 // pred_check_branch
      %30 = sbr.rel (0) target = $region9
    $region8: #{predictor_forward.1} parent=1 // pred_region
      %32 = vsyncadd [#allocation6], 0
      %s33 = sshll.u32 %s1, 4
      %s34 = int_to_ptr.hbm [resolvable:$true] %s33
      %s35 = sshll.u32 [#allocation5], 4
      %s36 = int_to_ptr.vmem [resolvable:$true] %s35
      %41 = dma.hbm_to_vmem [thread:$0]  %s34, 6912, %s36, [#allocation6], 64, 64, 4
    $region9: #{predictor_forward.1} parent=1 // pred_fallthru
      _
    // Predicated region
    $region10: #{predictor_forward.1} parent=1 // pred_check
      _
    $region11: #{predictor_forward.1} parent=1 // pred_check_branch
      %43 = sbr.rel (0) target = $region13
    $region12: #{predictor_forward.1} parent=1 // pred_region
      _
    $region13: #{predictor_forward.1} parent=1 // pred_fallthru
      _
    // Predicated region
    $region14: #{predictor_forward.1} parent=1 // pred_check
      _
    $region15: #{predictor_forward.1} parent=1 // pred_check_branch
      %45 = sbr.rel (0) target = $region17
    $region16: #{predictor_forward.1} parent=1 // pred_region
      _
    $region17: #{predictor_forward.1} parent=1 // pred_fallthru
      _
    // Predicated region
    $region18: #{predictor_forward.1} parent=1 // pred_check
      _
    $region19: #{predictor_forward.1} parent=1 // pred_check_branch
      %47 = sbr.rel (0) target = $region21
    $region20: #{predictor_forward.1} parent=1 // pred_region
      _
    $region21: #{predictor_forward.1} parent=1 // pred_fallthru
      _
    // Predicated region
    $region22: #{predictor_forward.1} parent=1 // pred_check
      _
    $region23: #{predictor_forward.1} parent=1 // pred_check_branch
      %49 = sbr.rel (0) target = $region25
    $region24: #{predictor_forward.1} parent=1 // pred_region
      _
    $region25: #{predictor_forward.1} parent=1 // pred_fallthru
      _
    // Predicated region
    $region26: #{predictor_forward.1} parent=1 // pred_check
      _
    $region27: #{predictor_forward.1} parent=1 // pred_check_branch
      %51 = sbr.rel (0) target = $region29
    $region28: #{predictor_forward.1} parent=1 // pred_region
      _
    $region29: #{predictor_forward.1} parent=1 // pred_fallthru
      _
    // Predicated region
    $region30: #{predictor_forward.1} parent=1 // pred_check
      _
    $region31: #{predictor_forward.1} parent=1 // pred_check_branch
      %53 = sbr.rel (0) target = $region33
    $region32: #{predictor_forward.1} parent=1 // pred_region
      %55 = dma.done [#allocation3], 896
    $region33: #{predictor_forward.1} parent=1 // pred_fallthru
      _
    // Predicated region
    $region34: #{predictor_forward.1} parent=1 // pred_check
      _
    $region35: #{predictor_forward.1} parent=1 // pred_check_branch
      %57 = sbr.rel (0) target = $region37
    $region36: #{predictor_forward.1} parent=1 // pred_region
      %59 = dma.done [#allocation6], 6912
    $region37: #{predictor_forward.1} parent=1 // pred_fallthru
      _
    %v61 = vld [vmem:[%s2] sm:$0xf]
    %v62 = vld [vmem:[#allocation2] sm:$0xff]
    %v63 = vld [vmem:[#allocation2 + $0x8] sm:$0xff]
    %v64 = vld [vmem:[#allocation2 + $0x10] sm:$0xff]
    %v65 = vld [vmem:[#allocation2 + $0x18] sm:$0xff]
    %v66 = vld [vmem:[#allocation2 + $0x20] sm:$0xff]
    %v67 = vld [vmem:[#allocation2 + $0x28] sm:$0xff]
    %v68 = vld [vmem:[#allocation2 + $0x30] sm:$0xff]
    %v69 = vpack.c.bf16 %v62, %v62
    %v70 = vpack.c.bf16 %v63, %v63
    %v71 = vpack.c.bf16 %v64, %v64
    %v72 = vpack.c.bf16 %v65, %v65
    %v73 = vpack.c.bf16 %v66, %v66
    %v74 = vpack.c.bf16 %v67, %v67
    %v75 = vpack.c.bf16 %v68, %v68
    %v76 = vld [vmem:[#allocation5] sm:$0xf]
    %v77 = vld [vmem:[#allocation5 + $0x4] sm:$0xf]
    %v78 = vld [vmem:[#allocation5 + $0x8] sm:$0xf]
    %v79 = vld [vmem:[#allocation5 + $0xc] sm:$0xf]
    %v80 = vld [vmem:[#allocation5 + $0x10] sm:$0xf]
    %v81 = vld [vmem:[#allocation5 + $0x14] sm:$0xf]
    %v82 = vld [vmem:[#allocation5 + $0x18] sm:$0xf]
    %v83 = vld [vmem:[#allocation5 + $0x1c] sm:$0xf]
    %v84 = vld [vmem:[#allocation5 + $0x20] sm:$0xf]
    %v85 = vld [vmem:[#allocation5 + $0x24] sm:$0xf]
    %v86 = vld [vmem:[#allocation5 + $0x28] sm:$0xf]
    %v87 = vld [vmem:[#allocation5 + $0x2c] sm:$0xf]
    %v88 = vld [vmem:[#allocation5 + $0x30] sm:$0xf]
    %v89 = vld [vmem:[#allocation5 + $0x34] sm:$0xf]
    %v90 = vld [vmem:[#allocation5 + $0x38] sm:$0xf]
    %v91 = vld [vmem:[#allocation5 + $0x3c] sm:$0xf]
    %v92 = vld [vmem:[#allocation5 + $0x40] sm:$0xf]
    %v93 = vld [vmem:[#allocation5 + $0x44] sm:$0xf]
    %v94 = vld [vmem:[#allocation5 + $0x48] sm:$0xf]
    %v95 = vld [vmem:[#allocation5 + $0x4c] sm:$0xf]
    %v96 = vld [vmem:[#allocation5 + $0x50] sm:$0xf]
    %v97 = vld [vmem:[#allocation5 + $0x54] sm:$0xf]
    %v98 = vld [vmem:[#allocation5 + $0x58] sm:$0xf]
    %v99 = vld [vmem:[#allocation5 + $0x5c] sm:$0xf]
    %v100 = vld [vmem:[#allocation5 + $0x60] sm:$0xf]
    %v101 = vld [vmem:[#allocation5 + $0x64] sm:$0xf]
    %v102 = vld [vmem:[#allocation5 + $0x68] sm:$0xf]
    %v103 = vld [vmem:[#allocation5 + $0x6c] sm:$0xf]
    %v104 = vld [vmem:[#allocation5 + $0x70] sm:$0xf]
    %v105 = vld [vmem:[#allocation5 + $0x74] sm:$0xf]
    %v106 = vld [vmem:[#allocation5 + $0x78] sm:$0xf]
    %v107 = vld [vmem:[#allocation5 + $0x7c] sm:$0xf]
    %v108 = vld [vmem:[#allocation5 + $0x80] sm:$0xf]
    %v109 = vld [vmem:[#allocation5 + $0x84] sm:$0xf]
    %v110 = vld [vmem:[#allocation5 + $0x88] sm:$0xf]
    %v111 = vld [vmem:[#allocation5 + $0x8c] sm:$0xf]
    %v112 = vld [vmem:[#allocation5 + $0x90] sm:$0xf]
    %v113 = vld [vmem:[#allocation5 + $0x94] sm:$0xf]
    %v114 = vld [vmem:[#allocation5 + $0x98] sm:$0xf]
    %v115 = vld [vmem:[#allocation5 + $0x9c] sm:$0xf]
    %v116 = vld [vmem:[#allocation5 + $0xa0] sm:$0xf]
    %v117 = vld [vmem:[#allocation5 + $0xa4] sm:$0xf]
    %v118 = vld [vmem:[#allocation5 + $0xa8] sm:$0xf]
    %v119 = vld [vmem:[#allocation5 + $0xac] sm:$0xf]
    %v120 = vld [vmem:[#allocation5 + $0xb0] sm:$0xf]
    %v121 = vld [vmem:[#allocation5 + $0xb4] sm:$0xf]
    %v122 = vld [vmem:[#allocation5 + $0xb8] sm:$0xf]
    %v123 = vld [vmem:[#allocation5 + $0xbc] sm:$0xf]
    %v124 = vld [vmem:[#allocation5 + $0xc0] sm:$0xf]
    %v125 = vld [vmem:[#allocation5 + $0xc4] sm:$0xf]
    %v126 = vld [vmem:[#allocation5 + $0xc8] sm:$0xf]
    %v127 = vld [vmem:[#allocation5 + $0xcc] sm:$0xf]
    %v128 = vld [vmem:[#allocation5 + $0xd0] sm:$0xf]
    %v129 = vld [vmem:[#allocation5 + $0xd4] sm:$0xf]
    %v130 = vld [vmem:[#allocation5 + $0xd8] sm:$0xf]
    %v131 = vld [vmem:[#allocation5 + $0xdc] sm:$0xf]
    %v132 = vld [vmem:[#allocation5 + $0xe0] sm:$0xf]
    %v133 = vld [vmem:[#allocation5 + $0xe4] sm:$0xf]
    %v134 = vld [vmem:[#allocation5 + $0xe8] sm:$0xf]
    %v135 = vld [vmem:[#allocation5 + $0xec] sm:$0xf]
    %v136 = vld [vmem:[#allocation5 + $0xf0] sm:$0xf]
    %v137 = vld [vmem:[#allocation5 + $0xf4] sm:$0xf]
    %v138 = vld [vmem:[#allocation5 + $0xf8] sm:$0xf]
    %v139 = vld [vmem:[#allocation5 + $0xfc] sm:$0xf]
    %v140 = vld [vmem:[#allocation5 + $0x100] sm:$0xf]
    %v141 = vld [vmem:[#allocation5 + $0x104] sm:$0xf]
    %v142 = vld [vmem:[#allocation5 + $0x108] sm:$0xf]
    %v143 = vld [vmem:[#allocation5 + $0x10c] sm:$0xf]
    %v144 = vld [vmem:[#allocation5 + $0x110] sm:$0xf]
    %v145 = vld [vmem:[#allocation5 + $0x114] sm:$0xf]
    %v146 = vld [vmem:[#allocation5 + $0x118] sm:$0xf]
    %v147 = vld [vmem:[#allocation5 + $0x11c] sm:$0xf]
    %v148 = vld [vmem:[#allocation5 + $0x120] sm:$0xf]
    %v149 = vld [vmem:[#allocation5 + $0x124] sm:$0xf]
    %v150 = vld [vmem:[#allocation5 + $0x128] sm:$0xf]
    %v151 = vld [vmem:[#allocation5 + $0x12c] sm:$0xf]
    %v152 = vld [vmem:[#allocation5 + $0x130] sm:$0xf]
    %v153 = vld [vmem:[#allocation5 + $0x134] sm:$0xf]
    %v154 = vld [vmem:[#allocation5 + $0x138] sm:$0xf]
    %v155 = vld [vmem:[#allocation5 + $0x13c] sm:$0xf]
    %v156 = vld [vmem:[#allocation5 + $0x140] sm:$0xf]
    %v157 = vld [vmem:[#allocation5 + $0x144] sm:$0xf]
    %v158 = vld [vmem:[#allocation5 + $0x148] sm:$0xf]
    %v159 = vld [vmem:[#allocation5 + $0x14c] sm:$0xf]
    %v160 = vld [vmem:[#allocation5 + $0x150] sm:$0xf]
    %v161 = vld [vmem:[#allocation5 + $0x154] sm:$0xf]
    %v162 = vld [vmem:[#allocation5 + $0x158] sm:$0xf]
    %v163 = vld [vmem:[#allocation5 + $0x15c] sm:$0xf]
    %v164 = vld [vmem:[#allocation5 + $0x160] sm:$0xf]
    %v165 = vld [vmem:[#allocation5 + $0x164] sm:$0xf]
    %v166 = vld [vmem:[#allocation5 + $0x168] sm:$0xf]
    %v167 = vld [vmem:[#allocation5 + $0x16c] sm:$0xf]
    %v168 = vld [vmem:[#allocation5 + $0x170] sm:$0xf]
    %v169 = vld [vmem:[#allocation5 + $0x174] sm:$0xf]
    %v170 = vld [vmem:[#allocation5 + $0x178] sm:$0xf]
    %v171 = vld [vmem:[#allocation5 + $0x17c] sm:$0xf]
    %v172 = vld [vmem:[#allocation5 + $0x180] sm:$0xf]
    %v173 = vld [vmem:[#allocation5 + $0x184] sm:$0xf]
    %v174 = vld [vmem:[#allocation5 + $0x188] sm:$0xf]
    %v175 = vld [vmem:[#allocation5 + $0x18c] sm:$0xf]
    %v176 = vld [vmem:[#allocation5 + $0x190] sm:$0xf]
    %v177 = vld [vmem:[#allocation5 + $0x194] sm:$0xf]
    %v178 = vld [vmem:[#allocation5 + $0x198] sm:$0xf]
    %v179 = vld [vmem:[#allocation5 + $0x19c] sm:$0xf]
    %v180 = vld [vmem:[#allocation5 + $0x1a0] sm:$0xf]
    %v181 = vld [vmem:[#allocation5 + $0x1a4] sm:$0xf]
    %v182 = vld [vmem:[#allocation5 + $0x1a8] sm:$0xf]
    %v183 = vld [vmem:[#allocation5 + $0x1ac] sm:$0xf]
    %v292 = vunpack.c.l.b16 %v76
    %v293 = vunpack.c.l.b16 %v77
    %v294 = vunpack.c.l.b16 %v78
    %v295 = vunpack.c.l.b16 %v79
    %v296 = vunpack.c.l.b16 %v80
    %v297 = vunpack.c.l.b16 %v81
    %v298 = vunpack.c.l.b16 %v82
    %v299 = vunpack.c.l.b16 %v83
    %v300 = vunpack.c.l.b16 %v84
    %v301 = vunpack.c.l.b16 %v85
    %v302 = vunpack.c.l.b16 %v86
    %v303 = vunpack.c.l.b16 %v87
    %v304 = vunpack.c.l.b16 %v88
    %v305 = vunpack.c.l.b16 %v89
    %v306 = vunpack.c.l.b16 %v90
    %v307 = vunpack.c.l.b16 %v91
    %v308 = vunpack.c.l.b16 %v92
    %v309 = vunpack.c.l.b16 %v93
    %v310 = vunpack.c.l.b16 %v94
    %v311 = vunpack.c.l.b16 %v95
    %v312 = vunpack.c.l.b16 %v96
    %v313 = vunpack.c.l.b16 %v97
    %v314 = vunpack.c.l.b16 %v98
    %v315 = vunpack.c.l.b16 %v99
    %v316 = vunpack.c.l.b16 %v100
    %v317 = vunpack.c.l.b16 %v101
    %v318 = vunpack.c.l.b16 %v102
    %v319 = vunpack.c.l.b16 %v103
    %v320 = vunpack.c.l.b16 %v104
    %v321 = vunpack.c.l.b16 %v105
    %v322 = vunpack.c.l.b16 %v106
    %v323 = vunpack.c.l.b16 %v107
    %v324 = vunpack.c.l.b16 %v108
    %v325 = vunpack.c.l.b16 %v109
    %v326 = vunpack.c.l.b16 %v110
    %v327 = vunpack.c.l.b16 %v111
    %v328 = vunpack.c.l.b16 %v112
    %v329 = vunpack.c.l.b16 %v113
    %v330 = vunpack.c.l.b16 %v114
    %v331 = vunpack.c.l.b16 %v115
    %v332 = vunpack.c.l.b16 %v116
    %v333 = vunpack.c.l.b16 %v117
    %v334 = vunpack.c.l.b16 %v118
    %v335 = vunpack.c.l.b16 %v119
    %v336 = vunpack.c.l.b16 %v120
    %v337 = vunpack.c.l.b16 %v121
    %v338 = vunpack.c.l.b16 %v122
    %v339 = vunpack.c.l.b16 %v123
    %v340 = vunpack.c.l.b16 %v124
    %v341 = vunpack.c.l.b16 %v125
    %v342 = vunpack.c.l.b16 %v126
    %v343 = vunpack.c.l.b16 %v127
    %v344 = vunpack.c.l.b16 %v128
    %v345 = vunpack.c.l.b16 %v129
    %v346 = vunpack.c.l.b16 %v130
    %v347 = vunpack.c.l.b16 %v131
    %v348 = vunpack.c.l.b16 %v132
    %v349 = vunpack.c.l.b16 %v133
    %v350 = vunpack.c.l.b16 %v134
    %v351 = vunpack.c.l.b16 %v135
    %v352 = vunpack.c.l.b16 %v136
    %v353 = vunpack.c.l.b16 %v137
    %v354 = vunpack.c.l.b16 %v138
    %v355 = vunpack.c.l.b16 %v139
    %v356 = vunpack.c.l.b16 %v140
    %v357 = vunpack.c.l.b16 %v141
    %v358 = vunpack.c.l.b16 %v142
    %v359 = vunpack.c.l.b16 %v143
    %v360 = vunpack.c.l.b16 %v144
    %v361 = vunpack.c.l.b16 %v145
    %v362 = vunpack.c.l.b16 %v146
    %v363 = vunpack.c.l.b16 %v147
    %v364 = vunpack.c.l.b16 %v148
    %v365 = vunpack.c.l.b16 %v149
    %v366 = vunpack.c.l.b16 %v150
    %v367 = vunpack.c.l.b16 %v151
    %v368 = vunpack.c.l.b16 %v152
    %v369 = vunpack.c.l.b16 %v153
    %v370 = vunpack.c.l.b16 %v154
    %v371 = vunpack.c.l.b16 %v155
    %v372 = vunpack.c.l.b16 %v156
    %v373 = vunpack.c.l.b16 %v157
    %v374 = vunpack.c.l.b16 %v158
    %v375 = vunpack.c.l.b16 %v159
    %v376 = vunpack.c.l.b16 %v160
    %v377 = vunpack.c.l.b16 %v161
    %v378 = vunpack.c.l.b16 %v162
    %v379 = vunpack.c.l.b16 %v163
    %v380 = vunpack.c.l.b16 %v164
    %v381 = vunpack.c.l.b16 %v165
    %v382 = vunpack.c.l.b16 %v166
    %v383 = vunpack.c.l.b16 %v167
    %v384 = vunpack.c.l.b16 %v168
    %v385 = vunpack.c.l.b16 %v169
    %v386 = vunpack.c.l.b16 %v170
    %v387 = vunpack.c.l.b16 %v171
    %v388 = vunpack.c.l.b16 %v172
    %v389 = vunpack.c.l.b16 %v173
    %v390 = vunpack.c.l.b16 %v174
    %v391 = vunpack.c.l.b16 %v175
    %v392 = vunpack.c.l.b16 %v176
    %v393 = vunpack.c.l.b16 %v177
    %v394 = vunpack.c.l.b16 %v178
    %v395 = vunpack.c.l.b16 %v179
    %v396 = vunpack.c.l.b16 %v180
    %v397 = vunpack.c.l.b16 %v181
    %v398 = vunpack.c.l.b16 %v182
    %v399 = vunpack.c.l.b16 %v183
    %v400 = vpack.c.b16 %v293, %v292
    %v401 = vpack.c.b16 %v295, %v294
    %v402 = vpack.c.b16 %v297, %v296
    %v403 = vpack.c.b16 %v299, %v298
    %v404 = vpack.c.b16 %v301, %v300
    %v405 = vpack.c.b16 %v303, %v302
    %v406 = vpack.c.b16 %v305, %v304
    %v407 = vpack.c.b16 %v307, %v306
    %v408 = vpack.c.b16 %v309, %v308
    %v409 = vpack.c.b16 %v311, %v310
    %v410 = vpack.c.b16 %v313, %v312
    %v411 = vpack.c.b16 %v315, %v314
    %v412 = vpack.c.b16 %v317, %v316
    %v413 = vpack.c.b16 %v319, %v318
    %v414 = vpack.c.b16 %v321, %v320
    %v415 = vpack.c.b16 %v323, %v322
    %v416 = vpack.c.b16 %v325, %v324
    %v417 = vpack.c.b16 %v327, %v326
    %v418 = vpack.c.b16 %v329, %v328
    %v419 = vpack.c.b16 %v331, %v330
    %v420 = vpack.c.b16 %v333, %v332
    %v421 = vpack.c.b16 %v335, %v334
    %v422 = vpack.c.b16 %v337, %v336
    %v423 = vpack.c.b16 %v339, %v338
    %v424 = vpack.c.b16 %v341, %v340
    %v425 = vpack.c.b16 %v343, %v342
    %v426 = vpack.c.b16 %v345, %v344
    %v427 = vpack.c.b16 %v347, %v346
    %v428 = vpack.c.b16 %v349, %v348
    %v429 = vpack.c.b16 %v351, %v350
    %v430 = vpack.c.b16 %v353, %v352
    %v431 = vpack.c.b16 %v355, %v354
    %v432 = vpack.c.b16 %v357, %v356
    %v433 = vpack.c.b16 %v359, %v358
    %v434 = vpack.c.b16 %v361, %v360
    %v435 = vpack.c.b16 %v363, %v362
    %v436 = vpack.c.b16 %v365, %v364
    %v437 = vpack.c.b16 %v367, %v366
    %v438 = vpack.c.b16 %v369, %v368
    %v439 = vpack.c.b16 %v371, %v370
    %v440 = vpack.c.b16 %v373, %v372
    %v441 = vpack.c.b16 %v375, %v374
    %v442 = vpack.c.b16 %v377, %v376
    %v443 = vpack.c.b16 %v379, %v378
    %v444 = vpack.c.b16 %v381, %v380
    %v445 = vpack.c.b16 %v383, %v382
    %v446 = vpack.c.b16 %v385, %v384
    %v447 = vpack.c.b16 %v387, %v386
    %v448 = vpack.c.b16 %v389, %v388
    %v449 = vpack.c.b16 %v391, %v390
    %v450 = vpack.c.b16 %v393, %v392
    %v451 = vpack.c.b16 %v395, %v394
    %v452 = vpack.c.b16 %v397, %v396
    %v453 = vpack.c.b16 %v399, %v398
    %vm508 = vcmask 785408
    %v510 = vsel %vm508, %v75, 0
    %512 = vmatpush.bf16.msra.mxu0 %v407
    %513 = vmatpush.bf16.msra.mxu0 %v406
    %514 = vmatpush.bf16.msra.mxu0 %v405
    %515 = vmatpush.bf16.msra.mxu0 %v404
    %516 = vmatpush.bf16.msra.mxu0 %v403
    %517 = vmatpush.bf16.msra.mxu0 %v402
    %518 = vmatpush.bf16.msra.mxu0 %v401
    %519 = vmatpush.bf16.msra.mxu0 %v400
    %520 = vmatmul.bf16.gmra.mxu0 %v69
    %v521 = vpop.f32.mrf.mxu0
    %v522 = vadd.f32 0.0, %v521
    %v523 = vpop.f32.mrf.mxu0
    %524 = vdwg.mxu0
    %525 = vmatpush.bf16.msra.mxu0 %v415
    %526 = vmatpush.bf16.msra.mxu0 %v414
    %527 = vmatpush.bf16.msra.mxu0 %v413
    %528 = vmatpush.bf16.msra.mxu0 %v412
    %529 = vmatpush.bf16.msra.mxu0 %v411
    %530 = vmatpush.bf16.msra.mxu0 %v410
    %531 = vmatpush.bf16.msra.mxu0 %v409
    %532 = vmatpush.bf16.msra.mxu0 %v408
    %533 = vmatmul.bf16.gmra.mxu0 %v70
    %v534 = vpop.f32.mrf.mxu0
    %v535 = vadd.f32 %v522, %v534
    %v536 = vpop.f32.mrf.mxu0
    %537 = vdwg.mxu0
    %538 = vmatpush.bf16.msra.mxu0 %v423
    %539 = vmatpush.bf16.msra.mxu0 %v422
    %540 = vmatpush.bf16.msra.mxu0 %v421
    %541 = vmatpush.bf16.msra.mxu0 %v420
    %542 = vmatpush.bf16.msra.mxu0 %v419
    %543 = vmatpush.bf16.msra.mxu0 %v418
    %544 = vmatpush.bf16.msra.mxu0 %v417
    %545 = vmatpush.bf16.msra.mxu0 %v416
    %546 = vmatmul.bf16.gmra.mxu0 %v71
    %v547 = vpop.f32.mrf.mxu0
    %v548 = vadd.f32 %v535, %v547
    %v549 = vpop.f32.mrf.mxu0
    %550 = vdwg.mxu0
    %551 = vmatpush.bf16.msra.mxu0 %v431
    %552 = vmatpush.bf16.msra.mxu0 %v430
    %553 = vmatpush.bf16.msra.mxu0 %v429
    %554 = vmatpush.bf16.msra.mxu0 %v428
    %555 = vmatpush.bf16.msra.mxu0 %v427
    %556 = vmatpush.bf16.msra.mxu0 %v426
    %557 = vmatpush.bf16.msra.mxu0 %v425
    %558 = vmatpush.bf16.msra.mxu0 %v424
    %559 = vmatmul.bf16.gmra.mxu0 %v72
    %v560 = vpop.f32.mrf.mxu0
    %v561 = vadd.f32 %v548, %v560
    %v562 = vpop.f32.mrf.mxu0
    %563 = vdwg.mxu0
    %564 = vmatpush.bf16.msra.mxu0 %v439
    %565 = vmatpush.bf16.msra.mxu0 %v438
    %566 = vmatpush.bf16.msra.mxu0 %v437
    %567 = vmatpush.bf16.msra.mxu0 %v436
    %568 = vmatpush.bf16.msra.mxu0 %v435
    %569 = vmatpush.bf16.msra.mxu0 %v434
    %570 = vmatpush.bf16.msra.mxu0 %v433
    %571 = vmatpush.bf16.msra.mxu0 %v432
    %572 = vmatmul.bf16.gmra.mxu0 %v73
    %v573 = vpop.f32.mrf.mxu0
    %v574 = vadd.f32 %v561, %v573
    %v575 = vpop.f32.mrf.mxu0
    %576 = vdwg.mxu0
    %577 = vmatpush.bf16.msra.mxu0 %v447
    %578 = vmatpush.bf16.msra.mxu0 %v446
    %579 = vmatpush.bf16.msra.mxu0 %v445
    %580 = vmatpush.bf16.msra.mxu0 %v444
    %581 = vmatpush.bf16.msra.mxu0 %v443
    %582 = vmatpush.bf16.msra.mxu0 %v442
    %583 = vmatpush.bf16.msra.mxu0 %v441
    %584 = vmatpush.bf16.msra.mxu0 %v440
    %585 = vmatmul.bf16.gmra.mxu0 %v74
    %v586 = vpop.f32.mrf.mxu0
    %v587 = vadd.f32 %v574, %v586
    %v588 = vpop.f32.mrf.mxu0
    %589 = vdwg.mxu0
    %590 = vmatpush.bf16.msra.mxu0 0
    %591 = vmatpush.bf16.msra.mxu0 0
    %592 = vmatpush.bf16.msra.mxu0 %v453
    %593 = vmatpush.bf16.msra.mxu0 %v452
    %594 = vmatpush.bf16.msra.mxu0 %v451
    %595 = vmatpush.bf16.msra.mxu0 %v450
    %596 = vmatpush.bf16.msra.mxu0 %v449
    %597 = vmatpush.bf16.msra.mxu0 %v448
    %598 = vmatmul.bf16.gmra.mxu0 %v510
    %v599 = vpop.f32.mrf.mxu0
    %v600 = vadd.f32 %v587, %v599
    %v601 = vpop.f32.mrf.mxu0
    %602 = vdwg.mxu0
    %v603 = vrot.slane %v600, 4
    %v604 = vadd.f32 %v600, %v603
    %v605 = vrot.slane %v604, 2
    %v606 = vadd.f32 %v604, %v605
    %v607 = vrot.slane %v606, 1
    %v608 = vadd.f32 %v606, %v607
    %v609 = vrcp.pop 8.0
    %v610 = vmul.f32 8.0, %v609
    %v611 = vsub.f32 1.0, %v610
    %v612 = vmul.f32 %v609, %v611
    %v613 = vadd.f32 %v609, %v612
    %vm614 = vweird.f32 %v609
    %v615 = vsel %vm614, %v609, %v613
    %v616 = vmul.f32 %v608, %v615
    %v617 = vsub.f32 %v600, %v616
    %v618 = vmul.f32 %v617, %v617
    %v619 = vrot.slane %v618, 4
    %v620 = vadd.f32 %v618, %v619
    %v621 = vrot.slane %v620, 2
    %v622 = vadd.f32 %v620, %v621
    %v623 = vrot.slane %v622, 1
    %v624 = vadd.f32 %v622, %v623
    %v625 = vmul.f32 %v624, %v615
    %v626 = vadd.f32 %v625, 1e-05
    %v627 = vrsqrt.pop %v626
    %v628 = vmul.f32 %v627, %v626
    %v629 = vmul.f32 %v628, %v627
    %v630 = vmul.f32 0.5, %v629
    %v631 = vsub.f32 1.5, %v630
    %v632 = vmul.f32 %v627, %v631
    %vm633 = vweird.f32 %v626
    %vm634 = vweird.f32 %v627
    %vm635 = vmor %vm633, %vm634
    %v636 = vsel %vm635, %v627, %v632
    %v637 = vmul.f32 %v617, %v636
    %v638 = vperm.slane %v61, 0
    %v639 = vmul.f32 %v637, %v638
    %v640 = vperm.slane %v61, 1
    %v641 = vadd.f32 %v639, %v640
    %v642 = vmax.f32 %v641, 0.0
    %v643 = vpack.c.bf16 %v642, %v642
    %v644 = vld [vmem:[%s3] sm:$0xf]
    %v645 = vld [vmem:[%s3 + $0x4] sm:$0xf]
    %v646 = vld [vmem:[%s3 + $0x8] sm:$0xf]
    %v647 = vld [vmem:[%s3 + $0xc] sm:$0xf]
    %v648 = vld [vmem:[%s3 + $0x10] sm:$0xf]
    %v649 = vld [vmem:[%s3 + $0x14] sm:$0xf]
    %v650 = vld [vmem:[%s3 + $0x18] sm:$0xf]
    %v651 = vld [vmem:[%s3 + $0x1c] sm:$0xf]
    %v652 = vld [vmem:[%s3 + $0x20] sm:$0xf]
    %v653 = vld [vmem:[%s3 + $0x24] sm:$0xf]
    %v654 = vld [vmem:[%s3 + $0x28] sm:$0xf]
    %v655 = vld [vmem:[%s3 + $0x2c] sm:$0xf]
    %v656 = vld [vmem:[%s3 + $0x30] sm:$0xf]
    %v657 = vld [vmem:[%s3 + $0x34] sm:$0xf]
    %v658 = vld [vmem:[%s3 + $0x38] sm:$0xf]
    %v659 = vld [vmem:[%s3 + $0x3c] sm:$0xf]
    %v676 = vunpack.c.l.b16 %v644
    %v677 = vunpack.c.l.b16 %v645
    %v678 = vunpack.c.l.b16 %v646
    %v679 = vunpack.c.l.b16 %v647
    %v680 = vunpack.c.l.b16 %v648
    %v681 = vunpack.c.l.b16 %v649
    %v682 = vunpack.c.l.b16 %v650
    %v683 = vunpack.c.l.b16 %v651
    %v684 = vunpack.c.l.b16 %v652
    %v685 = vunpack.c.l.b16 %v653
    %v686 = vunpack.c.l.b16 %v654
    %v687 = vunpack.c.l.b16 %v655
    %v688 = vunpack.c.l.b16 %v656
    %v689 = vunpack.c.l.b16 %v657
    %v690 = vunpack.c.l.b16 %v658
    %v691 = vunpack.c.l.b16 %v659
    %v692 = vpack.c.b16 %v677, %v676
    %v693 = vpack.c.b16 %v679, %v678
    %v694 = vpack.c.b16 %v681, %v680
    %v695 = vpack.c.b16 %v683, %v682
    %v696 = vpack.c.b16 %v685, %v684
    %v697 = vpack.c.b16 %v687, %v686
    %v698 = vpack.c.b16 %v689, %v688
    %v699 = vpack.c.b16 %v691, %v690
    %708 = vmatpush.bf16.msra.mxu0 %v699
    %709 = vmatpush.bf16.msra.mxu0 %v698
    %710 = vmatpush.bf16.msra.mxu0 %v697
    %711 = vmatpush.bf16.msra.mxu0 %v696
    %712 = vmatpush.bf16.msra.mxu0 %v695
    %713 = vmatpush.bf16.msra.mxu0 %v694
    %714 = vmatpush.bf16.msra.mxu0 %v693
    %715 = vmatpush.bf16.msra.mxu0 %v692
    %716 = vmatmul.bf16.gmra.mxu0 %v643
    %v717 = vpop.f32.mrf.mxu0
    %v718 = vadd.f32 0.0, %v717
    %v719 = vpop.f32.mrf.mxu0
    %720 = vdwg.mxu0
    %v721 = vrot.slane %v718, 4
    %v722 = vadd.f32 %v718, %v721
    %v723 = vrot.slane %v722, 2
    %v724 = vadd.f32 %v722, %v723
    %v725 = vrot.slane %v724, 1
    %v726 = vadd.f32 %v724, %v725
    %v727 = vmul.f32 %v726, %v615
    %v728 = vsub.f32 %v718, %v727
    %v729 = vmul.f32 %v728, %v728
    %v730 = vrot.slane %v729, 4
    %v731 = vadd.f32 %v729, %v730
    %v732 = vrot.slane %v731, 2
    %v733 = vadd.f32 %v731, %v732
    %v734 = vrot.slane %v733, 1
    %v735 = vadd.f32 %v733, %v734
    %v736 = vmul.f32 %v735, %v615
    %v737 = vadd.f32 %v736, 1e-05
    %v738 = vrsqrt.pop %v737
    %v739 = vmul.f32 %v738, %v737
    %v740 = vmul.f32 %v739, %v738
    %v741 = vmul.f32 0.5, %v740
    %v742 = vsub.f32 1.5, %v741
    %v743 = vmul.f32 %v738, %v742
    %vm744 = vweird.f32 %v737
    %vm745 = vweird.f32 %v738
    %vm746 = vmor %vm744, %vm745
    %v747 = vsel %vm746, %v738, %v743
    %v748 = vmul.f32 %v728, %v747
    %v749 = vperm.slane %v61, 2
    %v750 = vmul.f32 %v748, %v749
    %v751 = vperm.slane %v61, 3
    %v752 = vadd.f32 %v750, %v751
    %v753 = vmax.f32 %v752, 0.0
    %v754 = vld [vmem:[%s6] sm:$0xf]
    %v755 = vld [vmem:[%s5] sm:$0xff]
    %v756 = vpack.c.bf16 %v753, %v753
    %v757 = vld [vmem:[%s4] sm:$0xf]
    %v758 = vld [vmem:[%s4 + $0x4] sm:$0xf]
    %v759 = vld [vmem:[%s4 + $0x8] sm:$0xf]
    %v760 = vld [vmem:[%s4 + $0xc] sm:$0xf]
    %v761 = vld [vmem:[%s4 + $0x10] sm:$0xf]
    %v762 = vld [vmem:[%s4 + $0x14] sm:$0xf]
    %v763 = vld [vmem:[%s4 + $0x18] sm:$0xf]
    %v764 = vld [vmem:[%s4 + $0x1c] sm:$0xf]
    %v765 = vld [vmem:[%s4 + $0x20] sm:$0xf]
    %v766 = vld [vmem:[%s4 + $0x24] sm:$0xf]
    %v767 = vld [vmem:[%s4 + $0x28] sm:$0xf]
    %v768 = vld [vmem:[%s4 + $0x2c] sm:$0xf]
    %v769 = vld [vmem:[%s4 + $0x30] sm:$0xf]
    %v770 = vld [vmem:[%s4 + $0x34] sm:$0xf]
    %v771 = vld [vmem:[%s4 + $0x38] sm:$0xf]
    %v772 = vld [vmem:[%s4 + $0x3c] sm:$0xf]
    %v773 = vperm.slane %v754, 3
    %v790 = vunpack.c.l.b16 %v757
    %v791 = vunpack.c.l.b16 %v758
    %v792 = vunpack.c.l.b16 %v759
    %v793 = vunpack.c.l.b16 %v760
    %v794 = vunpack.c.l.b16 %v761
    %v795 = vunpack.c.l.b16 %v762
    %v796 = vunpack.c.l.b16 %v763
    %v797 = vunpack.c.l.b16 %v764
    %v798 = vunpack.c.l.b16 %v765
    %v799 = vunpack.c.l.b16 %v766
    %v800 = vunpack.c.l.b16 %v767
    %v801 = vunpack.c.l.b16 %v768
    %v802 = vunpack.c.l.b16 %v769
    %v803 = vunpack.c.l.b16 %v770
    %v804 = vunpack.c.l.b16 %v771
    %v805 = vunpack.c.l.b16 %v772
    %v806 = vpack.c.b16 %v791, %v790
    %v807 = vpack.c.b16 %v793, %v792
    %v808 = vpack.c.b16 %v795, %v794
    %v809 = vpack.c.b16 %v797, %v796
    %v810 = vpack.c.b16 %v799, %v798
    %v811 = vpack.c.b16 %v801, %v800
    %v812 = vpack.c.b16 %v803, %v802
    %v813 = vpack.c.b16 %v805, %v804
    %822 = vmatpush.bf16.msra.mxu0 %v813
    %823 = vmatpush.bf16.msra.mxu0 %v812
    %824 = vmatpush.bf16.msra.mxu0 %v811
    %825 = vmatpush.bf16.msra.mxu0 %v810
    %826 = vmatpush.bf16.msra.mxu0 %v809
    %827 = vmatpush.bf16.msra.mxu0 %v808
    %828 = vmatpush.bf16.msra.mxu0 %v807
    %829 = vmatpush.bf16.msra.mxu0 %v806
    %830 = vmatmul.bf16.gmra.mxu0 %v756
    %v831 = vpop.f32.mrf.mxu0
    %v832 = vadd.f32 %v773, %v831
    %v833 = vpop.f32.mrf.mxu0
    %834 = vdwg.mxu0
    %836 = vset.pattern.permute.xlu0 0
    %837 = vperm.xlu0 %836, %v755
    %v838 = vpop.permute.xlu0 %837
    %v840 = vperm.slane %v754, 0
    %v841 = vmul.f32 %v838, %v840
    %v842 = vadd.f32 %v832, %v841
    %843 = vset.pattern.permute.xlu0 1
    %844 = vperm.xlu0 %843, %v755
    %v845 = vpop.permute.xlu0 %844
    %v847 = vperm.slane %v754, 1
    %v848 = vmul.f32 %v845, %v847
    %v849 = vadd.f32 %v842, %v848
    %850 = vset.pattern.permute.xlu0 2
    %851 = vperm.xlu0 %850, %v755
    %v852 = vpop.permute.xlu0 %851
    %v854 = vperm.slane %v754, 2
    %v855 = vmul.f32 %v852, %v854
    %v856 = vadd.f32 %v849, %v855
    %vm857 = vcmask 39936
    %858 = vst.msk [vmem:[#allocation8] sm:$0xff] %vm857, %v856
    %v859 = vsel %vm857, %v856, -inf
    %860 = vmax.xlane.f32.xlu0 %v859
    %v861 = vpop.xlane.xlu0 %860
    %v862 = vsub.f32 %v856, %v861
    %v863 = vmul.f32 %v862, 1.442695
    %v864 = vpow.pop %v863
    %v865 = vsel %vm857, %v864, 0.0
    %866 = vadd.xlane.f32.xlu0 %v865
    %v867 = vpop.xlane.xlu0 %866
    %v868 = vrcp.pop %v867
    %v869 = vmul.f32 %v867, %v868
    %v870 = vsub.f32 1.0, %v869
    %v871 = vmul.f32 %v868, %v870
    %v872 = vadd.f32 %v868, %v871
    %vm873 = vweird.f32 %v867
    %vm874 = vweird.f32 %v868
    %vm875 = vmor %vm873, %vm874
    %v876 = vsel %vm875, %v868, %v872
    %v877 = vand.u32 2147483647, %v867
    %vm878 = vcmp.eq.f32.partialorder %v877, 8.507059e+37
    %v879 = vand.u32 %v867, 2147483648
    %v880 = vor.u32 1.1754944e-38, %v879
    %v881 = vsel %vm878, %v880, %v876
    %v882 = vmul.f32 %v864, %v881
    %883 = vst.msk [vmem:[#allocation7] sm:$0xff] %vm857, %v882
    // Predicated region
    $region38: #{predictor_forward.1} parent=1 // pred_check
      _
    $region39: #{predictor_forward.1} parent=1 // pred_check_branch
      %885 = sbr.rel (0) target = $region41
    $region40: #{predictor_forward.1} parent=1 // pred_region
      %887 = vsyncadd [#allocation4], 0
      %s889 = sshll.u32 [#allocation7], 4
      %s890 = int_to_ptr.vmem [resolvable:$true] %s889
      %s891 = sshll.u32 %s7, 4
      %s892 = int_to_ptr.hbm [resolvable:$true] %s891
      %894 = dma.vmem_to_hbm [thread:$0]  %s890, 128, %s892, [#allocation4]
    $region41: #{predictor_forward.1} parent=1 // pred_fallthru
      _
    // Predicated region
    $region42: #{predictor_forward.1} parent=1 // pred_check
      _
    $region43: #{predictor_forward.1} parent=1 // pred_check_branch
      %896 = sbr.rel (0) target = $region45
    $region44: #{predictor_forward.1} parent=1 // pred_region
      %898 = vsyncadd [#allocation9], 0
      %s900 = sshll.u32 [#allocation8], 4
      %s901 = int_to_ptr.vmem [resolvable:$true] %s900
      %s902 = sshll.u32 %s8, 4
      %s903 = int_to_ptr.hbm [resolvable:$true] %s902
      %905 = dma.vmem_to_hbm [thread:$0]  %s901, 128, %s903, [#allocation9]
    $region45: #{predictor_forward.1} parent=1 // pred_fallthru
      _
    // Predicated region
    $region46: #{predictor_forward.1} parent=1 // pred_check
      _
    $region47: #{predictor_forward.1} parent=1 // pred_check_branch
      %907 = sbr.rel (0) target = $region49
    $region48: #{predictor_forward.1} parent=1 // pred_region
      %909 = dma.done [#allocation4], 128
    $region49: #{predictor_forward.1} parent=1 // pred_fallthru
      _
    // Predicated region
    $region50: #{predictor_forward.1} parent=1 // pred_check
      _
    $region51: #{predictor_forward.1} parent=1 // pred_check_branch
      %911 = sbr.rel (0) target = $region53
    $region52: #{predictor_forward.1} parent=1 // pred_region
      %913 = dma.done [#allocation9], 128
    $region53: #{predictor_forward.1} parent=1 // pred_fallthru
      _
    %914 = vsyncpa [#allocation3], 1
    %915 = vsyncpa [#allocation6], 1
    %916 = vsyncpa [#allocation4], 1
    %917 = vsyncpa [#allocation9], 1

</llo_original>
